<compile_context>
chip_gen: v6e
topology: v6e:2x2x1
jax: 0.10.0
libtpu: 0.0.40
codegen_flags: <defaults>
</compile_context>

<pallas_src>
import jax
import jax.numpy as jnp
from jax.experimental import pallas as pl
from jax.experimental.pallas import tpu as pltpu

_LANE = 128


def _round_up(x, m):
    return (x + m - 1) // m * m


def _vmem_capacity_bytes():
    """Physical VMEM per core; conservative (v7x-sized) fallback if unknown."""
    try:
        return int(pltpu.get_tpu_info().vmem_capacity_bytes)
    except Exception:
        return 64 * 1024 * 1024


def _space_attention_kernel(x_ref, w1_ref, t1_ref, w2_ref, b2_ref, o_ref):
    # x_ref: (Cin, TILE_P) pixel tile -- channels on sublanes, pixels on lanes.
    x = x_ref[...]
    # 1x1 conv #1 with the BN scale folded into the weights, f32 accumulate.
    h = jnp.dot(w1_ref[...], x, preferred_element_type=jnp.float32)
    h = jnp.maximum(h + t1_ref[...], 0.0)                 # folded BN shift + ReLU
    # 1x1 conv #2, f32 accumulate.
    y = jnp.dot(w2_ref[...], h, preferred_element_type=jnp.float32)
    y = y + b2_ref[...]
    # Exact sigmoid: the kernel is HBM-bound, so the EUP exp/div are free.
    # On a ragged last tile the out-of-bounds lanes carry garbage through
    # exp/div, which is benign: there is no cross-pixel reduction and the
    # masked output store discards those lanes.
    o_ref[...] = (1.0 / (1.0 + jnp.exp(-y))).astype(o_ref.dtype)


def space_attention_forward(x_nchw, params):
    """x_nchw: (B, Cin, H, W).  Returns A = SA(x): (B, Cout, H, W)."""
    eps = 1e-5
    w1, b1 = params["w1"], params["b1"]               # (Cin, Cmid), (Cmid,)
    gamma, beta = params["gamma"], params["beta"]     # (Cmid,)
    rmean, rvar = params["rmean"], params["rvar"]     # (Cmid,)
    w2, b2 = params["w2"], params["b2"]               # (Cmid, Cout), (Cout,)

    b, cin, h, w = x_nchw.shape
    hw = h * w
    cmid = w1.shape[1]
    cout = w2.shape[1]
    cmid_p = _round_up(cmid, 8)       # hidden dim padded to a sublane multiple

    # ---- Fold BN (inference mode) + conv1 bias into W1 / shift, in f32 -----
    #   bn(W1@x + b1) = scale*(W1@x) + shift,  scale = gamma/sqrt(var+eps),
    #   shift = beta + scale*(b1 - mean);  scale distributes over the matmul.
    # TODO(synk): training-mode BatchNorm (batch statistics) is not implemented.
    scale1 = (gamma / jnp.sqrt(rvar + eps)).astype(jnp.float32)          # (Cmid,)
    shift1 = beta.astype(jnp.float32) + (b1 - rmean).astype(jnp.float32) * scale1
    w1s = jnp.zeros((cmid_p, cin), jnp.float32).at[:cmid, :].set(
        w1.astype(jnp.float32).T * scale1[:, None])
    w2t = jnp.zeros((cout, cmid_p), jnp.float32).at[:, :cmid].set(
        w2.astype(jnp.float32).T)
    t1 = jnp.zeros((cmid_p, 1), jnp.float32).at[:cmid, 0].set(shift1)
    b2c = b2.astype(jnp.float32).reshape(cout, 1)
    # Padded hidden rows are inert: zero weights + zero shift -> ReLU gives 0,
    # and W2's padded columns are zero, so they contribute nothing.

    # NCHW -> (B, Cin, H*W): free reshape (no transpose, no pad).
    x_flat = x_nchw.reshape(b, cin, hw)
    out_dtype = x_nchw.dtype

    # ---- Generation-aware VMEM budget & per-step byte target ---------------
    cap = _vmem_capacity_bytes()
    if cap >= 100 * 1024 * 1024:           # v5e / v6e: 128 MiB VMEM, 1 TC
        vmem_limit = 96 * 1024 * 1024
        tile_budget = 88 * 1024 * 1024
        x_target = 4 * 1024 * 1024         # bytes of x per grid step
        min_parallel = 1
    else:                                   # v7x-class: 64 MiB VMEM, 2 TCs
        vmem_limit = 48 * 1024 * 1024
        tile_budget = 40 * 1024 * 1024
        x_target = 8 * 1024 * 1024
        min_parallel = 2

    in_sz = x_nchw.dtype.itemsize
    out_sz = jnp.dtype(out_dtype).itemsize
    sub_in = max(1, 32 // in_sz)            # sublane multiple: 8 f32 / 16 bf16
    sub_out = max(1, 32 // out_sz)
    cin_pad = _round_up(cin, sub_in)
    cout_pad = _round_up(cout, sub_out)

    # Per-lane VMEM: double-buffered x/out tiles + single f32 intermediates h/y.
    per_px = (2 * (cin_pad * in_sz + cout_pad * out_sz)
              + (cmid_p + cout_pad) * 4)
    # Constant operands (counted double-buffered in case pinning falls back;
    # their lane dims pad to 128 in VMEM).
    w_bytes = 2 * ((cmid_p * _round_up(cin, _LANE)
                    + cout_pad * _round_up(cmid_p, _LANE)
                    + (cmid_p + cout_pad) * _LANE) * 4)
    budget = max(tile_budget - w_bytes, 1 << 20)

    # Lanes per step: hit the byte target, stay within the VMEM budget.
    max_lanes = min(x_target // max(1, cin * in_sz), budget // per_px)
    max_lanes = max(_LANE, max_lanes // _LANE * _LANE)
    # Keep >= min_parallel grid steps so both v7x TensorCores get work.
    if min_parallel > 1 and b < min_parallel and hw > _LANE:
        max_lanes = min(max_lanes,
                        max(_LANE, _round_up(pl.cdiv(hw, min_parallel), _LANE)))

    if hw <= max_lanes:
        tile = hw          # single full-extent tile (legal for any H*W)
    else:
        tile = max_lanes   # multiple of 128; last tile may be ragged (masked)
    n_pt = pl.cdiv(hw, tile)

    def run(pin_consts):
        const_kw = dict(pipeline_mode=pl.Buffered(1)) if pin_consts else {}
        grid_spec = pltpu.PrefetchScalarGridSpec(
            num_scalar_prefetch=0,
            grid=(b, n_pt),
            in_specs=[
                pl.BlockSpec((None, cin, tile), lambda bi, pi: (bi, 0, pi)),
                pl.BlockSpec((cmid_p, cin), lambda bi, pi: (0, 0), **const_kw),
                pl.BlockSpec((cmid_p, 1), lambda bi, pi: (0, 0), **const_kw),
                pl.BlockSpec((cout, cmid_p), lambda bi, pi: (0, 0), **const_kw),
                pl.BlockSpec((cout, 1), lambda bi, pi: (0, 0), **const_kw),
            ],
            out_specs=pl.BlockSpec((None, cout, tile),
                                   lambda bi, pi: (bi, 0, pi)),
        )
        return pl.pallas_call(
            _space_attention_kernel,
            out_shape=jax.ShapeDtypeStruct((b, cout, hw), out_dtype),
            grid_spec=grid_spec,
            compiler_params=pltpu.CompilerParams(
                dimension_semantics=("parallel", "parallel"),
                vmem_limit_bytes=vmem_limit),
        )(x_flat, w1s, t1, w2t, b2c)

    try:
        out_flat = run(True)
    except Exception:
        # pipeline_mode=pl.Buffered(1) unsupported on this jax build; the
        # constant blocks are tiny, so double-buffering them is a negligible
        # VMEM cost -- fall back to the plain specs.
        out_flat = run(False)

    # (B, Cout, H*W) -> (B, Cout, H, W): free reshape, still NCHW.
    return out_flat.reshape(b, cout, h, w)


def init_params(key, in_channels, out_channels, reduction=4, dtype=jnp.float32):
    cmid = max(1, in_channels // reduction)
    ks = jax.random.split(key, 8)
    bound1 = 1.0 / (in_channels ** 0.5)
    bound2 = 1.0 / (cmid ** 0.5)
    return {
        "w1": jax.random.uniform(ks[0], (in_channels, cmid), dtype, -bound1, bound1),
        "b1": jax.random.uniform(ks[1], (cmid,), dtype, -bound1, bound1),
        "gamma": jax.random.uniform(ks[2], (cmid,), dtype, 0.5, 1.5),
        "beta": 0.1 * jax.random.normal(ks[3], (cmid,), dtype),
        "rmean": 0.1 * jax.random.normal(ks[4], (cmid,), dtype),
        "rvar": jax.random.uniform(ks[5], (cmid,), dtype, 0.5, 1.5),
        "w2": jax.random.uniform(ks[6], (cmid, out_channels), dtype, -bound2, bound2),
        "b2": jax.random.uniform(ks[7], (out_channels,), dtype, -bound2, bound2),
    }


def _reference(x_nchw, params, eps=1e-5):
    """Pure-JAX reference (same math, no Pallas)."""
    x = jnp.transpose(x_nchw, (0, 2, 3, 1))                       # NHWC
    h = jnp.einsum("bhwc,cm->bhwm", x, params["w1"]) + params["b1"]
    h = params["gamma"] * (h - params["rmean"]) / jnp.sqrt(
        params["rvar"] + eps) + params["beta"]
    h = jnp.maximum(h, 0.0)
    y = jnp.einsum("bhwm,mo->bhwo", h, params["w2"]) + params["b2"]
    y = jax.nn.sigmoid(y)
    return jnp.transpose(y, (0, 3, 1, 2))                         # NCHW


if __name__ == "__main__":
    key = jax.random.PRNGKey(0)
    k1, k2, k3, k4 = jax.random.split(key, 4)

    # Test 1: small shape consistent with the module defaults.
    B, Cin, H, W = 2, 4, 16, 16
    Cout, reduction = 4, 4
    x = jax.random.normal(k1, (B, Cin, H, W), jnp.float32)
    params = init_params(k2, Cin, Cout, reduction)
    out = jax.block_until_ready(space_attention_forward(x, params))
    ref = _reference(x, params)
    assert out.shape == (B, Cout, H, W), out.shape
    assert jnp.allclose(out, ref, atol=1e-4, rtol=1e-4), (
        float(jnp.max(jnp.abs(out - ref))))

    # Test 2: batch 1 with non-128-multiple H*W (exercises the ragged last
    # tile / the 2-TensorCore split path on v7x-class parts).
    B2, Cin2, H2, W2 = 1, 8, 24, 24        # H*W = 576
    Cout2, red2 = 6, 2
    x2 = jax.random.normal(k3, (B2, Cin2, H2, W2), jnp.float32)
    params2 = init_params(k4, Cin2, Cout2, red2)
    out2 = jax.block_until_ready(space_attention_forward(x2, params2))
    ref2 = _reference(x2, params2)
    assert out2.shape == (B2, Cout2, H2, W2), out2.shape
    assert jnp.allclose(out2, ref2, atol=1e-4, rtol=1e-4), (
        float(jnp.max(jnp.abs(out2 - ref2))))

    print("KERNEL_OK")
</pallas_src>

<mosaic_0001>
module attributes {stable_mosaic.version = 11 : i64} {
  func.func @_space_attention_kernel(%arg0: i32, %arg1: i32, %arg2: memref<1x4x256xf32, #tpu.memory_space<vmem>>, %arg3: memref<8x4xf32, #tpu.memory_space<vmem>>, %arg4: memref<8x1xf32, #tpu.memory_space<vmem>>, %arg5: memref<4x8xf32, #tpu.memory_space<vmem>>, %arg6: memref<4x1xf32, #tpu.memory_space<vmem>>, %arg7: memref<1x4x256xf32, #tpu.memory_space<vmem>>) attributes {dimension_semantics = [#tpu.dimension_semantics<parallel>, #tpu.dimension_semantics<parallel>], iteration_bounds = array<i64: 2, 1>, scalar_prefetch = 0 : i64, scratch_operands = 0 : i64, tpu.core_type = #tpu.core_type<tc>, window_params = [{transform_indices = @transform_0, window_bounds = array<i64: 1, 4, 256>}, {pipeline_mode = #tpu.pipeline_mode<synchronous>, transform_indices = @transform_1, window_bounds = array<i64: 8, 4>}, {pipeline_mode = #tpu.pipeline_mode<synchronous>, transform_indices = @transform_2, window_bounds = array<i64: 8, 1>}, {pipeline_mode = #tpu.pipeline_mode<synchronous>, transform_indices = @transform_3, window_bounds = array<i64: 4, 8>}, {pipeline_mode = #tpu.pipeline_mode<synchronous>, transform_indices = @transform_4, window_bounds = array<i64: 4, 1>}, {transform_indices = @transform_5, window_bounds = array<i64: 1, 4, 256>}]} {
    %c0 = arith.constant 0 : index
    %c0_0 = arith.constant 0 : index
    %c0_1 = arith.constant 0 : index
    %0 = vector.load %arg2[%c0, %c0_0, %c0_1] : memref<1x4x256xf32, #tpu.memory_space<vmem>>, vector<1x4x256xf32>
    %1 = vector.shape_cast %0 : vector<1x4x256xf32> to vector<4x256xf32>
    %c0_2 = arith.constant 0 : index
    %c0_3 = arith.constant 0 : index
    %2 = vector.load %arg3[%c0_2, %c0_3] : memref<8x4xf32, #tpu.memory_space<vmem>>, vector<8x4xf32>
    %cst = arith.constant dense<0.000000e+00> : vector<8x256xf32>
    %3 = tpu.matmul %2, %1, %cst {dimension_numbers = #tpu.dot_dimension_numbers<[1], [0], [0], [1], [0, 0, 1, 1], [], []>} : vector<8x4xf32>, vector<4x256xf32>, vector<8x256xf32> -> vector<8x256xf32>
    %c0_4 = arith.constant 0 : index
    %c0_5 = arith.constant 0 : index
    %4 = vector.load %arg4[%c0_4, %c0_5] : memref<8x1xf32, #tpu.memory_space<vmem>>, vector<8x1xf32>
    %5 = vector.broadcast %4 : vector<8x1xf32> to vector<8x256xf32>
    %6 = arith.addf %3, %5 : vector<8x256xf32>
    %cst_6 = arith.constant 0.000000e+00 : f32
    %7 = vector.broadcast %cst_6 : f32 to vector<8x256xf32>
    %8 = arith.maximumf %6, %7 : vector<8x256xf32>
    %c0_7 = arith.constant 0 : index
    %c0_8 = arith.constant 0 : index
    %9 = vector.load %arg5[%c0_7, %c0_8] : memref<4x8xf32, #tpu.memory_space<vmem>>, vector<4x8xf32>
    %cst_9 = arith.constant dense<0.000000e+00> : vector<4x256xf32>
    %10 = tpu.matmul %9, %8, %cst_9 {dimension_numbers = #tpu.dot_dimension_numbers<[1], [0], [0], [1], [0, 0, 1, 1], [], []>} : vector<4x8xf32>, vector<8x256xf32>, vector<4x256xf32> -> vector<4x256xf32>
    %c0_10 = arith.constant 0 : index
    %c0_11 = arith.constant 0 : index
    %11 = vector.load %arg6[%c0_10, %c0_11] : memref<4x1xf32, #tpu.memory_space<vmem>>, vector<4x1xf32>
    %12 = vector.broadcast %11 : vector<4x1xf32> to vector<4x256xf32>
    %13 = arith.addf %10, %12 : vector<4x256xf32>
    %cst_12 = arith.constant 0.000000e+00 : f32
    %14 = vector.broadcast %cst_12 : f32 to vector<4x256xf32>
    %15 = arith.subf %14, %13 : vector<4x256xf32>
    %16 = math.exp %15 : vector<4x256xf32>
    %cst_13 = arith.constant 1.000000e+00 : f32
    %17 = vector.broadcast %cst_13 : f32 to vector<4x256xf32>
    %18 = arith.addf %17, %16 : vector<4x256xf32>
    %cst_14 = arith.constant 1.000000e+00 : f32
    %19 = vector.broadcast %cst_14 : f32 to vector<4x256xf32>
    %20 = arith.divf %19, %18 : vector<4x256xf32>
    %c0_15 = arith.constant 0 : index
    %c0_16 = arith.constant 0 : index
    %c0_17 = arith.constant 0 : index
    %21 = vector.load %arg7[%c0_15, %c0_16, %c0_17] : memref<1x4x256xf32, #tpu.memory_space<vmem>>, vector<1x4x256xf32>
    %22 = vector.shape_cast %21 : vector<1x4x256xf32> to vector<4x256xf32>
    %23 = vector.shape_cast %20 : vector<4x256xf32> to vector<1x4x256xf32>
    tpu.vector_store %arg7[%c0_15, %c0_16, %c0_17], %23 {strides = array<i32>} : memref<1x4x256xf32, #tpu.memory_space<vmem>>, vector<1x4x256xf32>,
    return
  }
  func.func @transform_0(%arg0: i32, %arg1: i32) -> (i32, i32, i32) {
    %c0_i32 = arith.constant 0 : i32
    %c0_i32_0 = arith.constant 0 : i32
    return %arg0, %c0_i32, %arg1 : i32, i32, i32
  }
  func.func @transform_1(%arg0: i32, %arg1: i32) -> (i32, i32) {
    %c0_i32 = arith.constant 0 : i32
    %c0_i32_0 = arith.constant 0 : i32
    %c0_i32_1 = arith.constant 0 : i32
    return %c0_i32, %c0_i32_0 : i32, i32
  }
  func.func @transform_2(%arg0: i32, %arg1: i32) -> (i32, i32) {
    %c0_i32 = arith.constant 0 : i32
    %c0_i32_0 = arith.constant 0 : i32
    %c0_i32_1 = arith.constant 0 : i32
    return %c0_i32, %c0_i32_0 : i32, i32
  }
  func.func @transform_3(%arg0: i32, %arg1: i32) -> (i32, i32) {
    %c0_i32 = arith.constant 0 : i32
    %c0_i32_0 = arith.constant 0 : i32
    %c0_i32_1 = arith.constant 0 : i32
    return %c0_i32, %c0_i32_0 : i32, i32
  }
  func.func @transform_4(%arg0: i32, %arg1: i32) -> (i32, i32) {
    %c0_i32 = arith.constant 0 : i32
    %c0_i32_0 = arith.constant 0 : i32
    %c0_i32_1 = arith.constant 0 : i32
    return %c0_i32, %c0_i32_0 : i32, i32
  }
  func.func @transform_5(%arg0: i32, %arg1: i32) -> (i32, i32, i32) {
    %c0_i32 = arith.constant 0 : i32
    %c0_i32_0 = arith.constant 0 : i32
    return %arg0, %c0_i32, %arg1 : i32, i32, i32
  }
}

module attributes {stable_mosaic.version = 11 : i64} {
  func.func @_space_attention_kernel(%arg0: i32, %arg1: i32, %arg2: memref<1x4x256xf32, #tpu.memory_space<vmem>>, %arg3: memref<8x4xf32, #tpu.memory_space<vmem>>, %arg4: memref<8x1xf32, #tpu.memory_space<vmem>>, %arg5: memref<4x8xf32, #tpu.memory_space<vmem>>, %arg6: memref<4x1xf32, #tpu.memory_space<vmem>>, %arg7: memref<1x4x256xf32, #tpu.memory_space<vmem>>) attributes {dimension_semantics = [#tpu.dimension_semantics<parallel>, #tpu.dimension_semantics<parallel>], iteration_bounds = array<i64: 2, 1>, scalar_prefetch = 0 : i64, scratch_operands = 0 : i64, tpu.core_type = #tpu.core_type<tc>, window_params = [{transform_indices = @transform_0, window_bounds = array<i64: 1, 4, 256>}, {pipeline_mode = #tpu.pipeline_mode<synchronous>, transform_indices = @transform_1, window_bounds = array<i64: 8, 4>}, {pipeline_mode = #tpu.pipeline_mode<synchronous>, transform_indices = @transform_2, window_bounds = array<i64: 8, 1>}, {pipeline_mode = #tpu.pipeline_mode<synchronous>, transform_indices = @transform_3, window_bounds = array<i64: 4, 8>}, {pipeline_mode = #tpu.pipeline_mode<synchronous>, transform_indices = @transform_4, window_bounds = array<i64: 4, 1>}, {transform_indices = @transform_5, window_bounds = array<i64: 1, 4, 256>}]} {
    %c0 = arith.constant 0 : index
    %c0_0 = arith.constant 0 : index
    %c0_1 = arith.constant 0 : index
    %0 = vector.load %arg2[%c0, %c0_0, %c0_1] : memref<1x4x256xf32, #tpu.memory_space<vmem>>, vector<1x4x256xf32>
    %1 = vector.shape_cast %0 : vector<1x4x256xf32> to vector<4x256xf32>
    %c0_2 = arith.constant 0 : index
    %c0_3 = arith.constant 0 : index
    %2 = vector.load %arg3[%c0_2, %c0_3] : memref<8x4xf32, #tpu.memory_space<vmem>>, vector<8x4xf32>
    %cst = arith.constant dense<0.000000e+00> : vector<8x256xf32>
    %3 = tpu.matmul %2, %1, %cst {dimension_numbers = #tpu.dot_dimension_numbers<[1], [0], [0], [1], [0, 0, 1, 1], [], []>} : vector<8x4xf32>, vector<4x256xf32>, vector<8x256xf32> -> vector<8x256xf32>
    %c0_4 = arith.constant 0 : index
    %c0_5 = arith.constant 0 : index
    %4 = vector.load %arg4[%c0_4, %c0_5] : memref<8x1xf32, #tpu.memory_space<vmem>>, vector<8x1xf32>
    %5 = vector.broadcast %4 : vector<8x1xf32> to vector<8x256xf32>
    %6 = arith.addf %3, %5 : vector<8x256xf32>
    %cst_6 = arith.constant 0.000000e+00 : f32
    %7 = vector.broadcast %cst_6 : f32 to vector<8x256xf32>
    %8 = arith.maximumf %6, %7 : vector<8x256xf32>
    %c0_7 = arith.constant 0 : index
    %c0_8 = arith.constant 0 : index
    %9 = vector.load %arg5[%c0_7, %c0_8] : memref<4x8xf32, #tpu.memory_space<vmem>>, vector<4x8xf32>
    %cst_9 = arith.constant dense<0.000000e+00> : vector<4x256xf32>
    %10 = tpu.matmul %9, %8, %cst_9 {dimension_numbers = #tpu.dot_dimension_numbers<[1], [0], [0], [1], [0, 0, 1, 1], [], []>} : vector<4x8xf32>, vector<8x256xf32>, vector<4x256xf32> -> vector<4x256xf32>
    %c0_10 = arith.constant 0 : index
    %c0_11 = arith.constant 0 : index
    %11 = vector.load %arg6[%c0_10, %c0_11] : memref<4x1xf32, #tpu.memory_space<vmem>>, vector<4x1xf32>
    %12 = vector.broadcast %11 : vector<4x1xf32> to vector<4x256xf32>
    %13 = arith.addf %10, %12 : vector<4x256xf32>
    %cst_12 = arith.constant 0.000000e+00 : f32
    %14 = vector.broadcast %cst_12 : f32 to vector<4x256xf32>
    %15 = arith.subf %14, %13 : vector<4x256xf32>
    %16 = math.exp %15 : vector<4x256xf32>
    %cst_13 = arith.constant 1.000000e+00 : f32
    %17 = vector.broadcast %cst_13 : f32 to vector<4x256xf32>
    %18 = arith.addf %17, %16 : vector<4x256xf32>
    %cst_14 = arith.constant 1.000000e+00 : f32
    %19 = vector.broadcast %cst_14 : f32 to vector<4x256xf32>
    %20 = arith.divf %19, %18 : vector<4x256xf32>
    %c0_15 = arith.constant 0 : index
    %c0_16 = arith.constant 0 : index
    %c0_17 = arith.constant 0 : index
    %21 = vector.load %arg7[%c0_15, %c0_16, %c0_17] : memref<1x4x256xf32, #tpu.memory_space<vmem>>, vector<1x4x256xf32>
    %22 = vector.shape_cast %21 : vector<1x4x256xf32> to vector<4x256xf32>
    %23 = vector.shape_cast %20 : vector<4x256xf32> to vector<1x4x256xf32>
    tpu.vector_store %arg7[%c0_15, %c0_16, %c0_17], %23 {strides = array<i32>} : memref<1x4x256xf32, #tpu.memory_space<vmem>>, vector<1x4x256xf32>,
    return
  }
  func.func @transform_0(%arg0: i32, %arg1: i32) -> (i32, i32, i32) {
    %c0_i32 = arith.constant 0 : i32
    %c0_i32_0 = arith.constant 0 : i32
    return %arg0, %c0_i32, %arg1 : i32, i32, i32
  }
  func.func @transform_1(%arg0: i32, %arg1: i32) -> (i32, i32) {
    %c0_i32 = arith.constant 0 : i32
    %c0_i32_0 = arith.constant 0 : i32
    %c0_i32_1 = arith.constant 0 : i32
    return %c0_i32, %c0_i32_0 : i32, i32
  }
  func.func @transform_2(%arg0: i32, %arg1: i32) -> (i32, i32) {
    %c0_i32 = arith.constant 0 : i32
    %c0_i32_0 = arith.constant 0 : i32
    %c0_i32_1 = arith.constant 0 : i32
    return %c0_i32, %c0_i32_0 : i32, i32
  }
  func.func @transform_3(%arg0: i32, %arg1: i32) -> (i32, i32) {
    %c0_i32 = arith.constant 0 : i32
    %c0_i32_0 = arith.constant 0 : i32
    %c0_i32_1 = arith.constant 0 : i32
    return %c0_i32, %c0_i32_0 : i32, i32
  }
  func.func @transform_4(%arg0: i32, %arg1: i32) -> (i32, i32) {
    %c0_i32 = arith.constant 0 : i32
    %c0_i32_0 = arith.constant 0 : i32
    %c0_i32_1 = arith.constant 0 : i32
    return %c0_i32, %c0_i32_0 : i32, i32
  }
  func.func @transform_5(%arg0: i32, %arg1: i32) -> (i32, i32, i32) {
    %c0_i32 = arith.constant 0 : i32
    %c0_i32_0 = arith.constant 0 : i32
    return %arg0, %c0_i32, %arg1 : i32, i32, i32
  }
}

</mosaic_0001>

<llo_original>
// kernel: tpu_custom_call.1
$region0: #{tpu_custom_call.1}
  #allocation0 [shape = 'u32[]', space=smem, size = 0x4, offset = 0x4, fixed_abs, tag = 'smem constant byte address 0x4 - core index']
  #allocation1 [shape = 'u32[144,128]{1,0:T(1,128)}', space=vmem, size = 0x12000, scoped, tag = 'internal scratch']
  %s0 = inlined_call_operand.vmem [shape: f32[2,4,256], index: 0, kind: input, shape index: {}]
  %s1 = inlined_call_operand.vmem [shape: f32[8,4], index: 1, kind: input, shape index: {}]
  %s2 = inlined_call_operand.vmem [shape: f32[8,1], index: 2, kind: input, shape index: {}]
  %s3 = inlined_call_operand.vmem [shape: f32[4,8], index: 3, kind: input, shape index: {}]
  %s4 = inlined_call_operand.vmem [shape: f32[4,1], index: 4, kind: input, shape index: {}]
  %s5 = inlined_call_operand.hbm [shape: f32[2,4,256], index: 5, kind: output, shape index: {}]
  %s6 = sld [smem:[#allocation0]]
  $region53: #{tpu_custom_call.1} parent=0
    _
  %s8 = ssub.s32 1, %s6
  %s9 = scalar_select 0, %s8, %s6
  $region1: #{tpu_custom_call.1} parent=0
    #allocation2 [shape = 'u8[8192]{0}', space=vmem, size = 0x2000, scoped, tag = 'output window, operand 0']
    #allocation3 [shape = 's32[2]{0}', space=sflag, size = 0x8, scoped, tag = 'scoped memory for tpu_custom_call.1']
    %10 = vsyncpa [#allocation3], 0
    %s11 = scalar_lea.sflag [#allocation3], 1
    %12 = vsyncpa %s11, 0
    loop: start=0, step=1, limit=4
    $region2: #{tpu_custom_call.1} parent=1 // loop_pre_header
      _
    $region3: #{tpu_custom_call.1} parent=1 // loop_header
      %s14 = sphi 0, %s18
      %p15 = scmp.ge.s32.totalorder %s14, 4
      %s21 = sphi 0, %s33
      %s22 = sphi 0, %s29
      %s23 = sphi 0, %s21
      %s24 = sphi 0, %s22
      %s25 = sphi 0, %s23
      %s26 = sphi 0, %s24
      %s38 = sphi 0, %s40
      %s41 = sphi 0, %s38
      %s42 = sphi 0, %s41
      %s58 = sphi 0, %s42
      %s62 = sphi 0, %s62
      %s64 = sphi 0, %s62
      %s65 = sphi 0, %s64
      %s79 = sphi 0, %s65
      %s83 = sphi 0, %s83
      %s85 = sphi 0, %s83
      %s86 = sphi 0, %s85
      %s100 = sphi 0, %s86
      %s104 = sphi 0, %s104
      %s106 = sphi 0, %s104
      %s107 = sphi 0, %s106
      %s121 = sphi 0, %s107
      %s125 = sphi 0, %s125
      %s127 = sphi 0, %s125
      %s128 = sphi 0, %s127
      %s142 = sphi 0, %s128
      %s150 = sphi 0, %s152
      %s153 = sphi 0, %s150
      %s154 = sphi 0, %s153
      %s170 = sphi 0, %s154
    $region4: #{tpu_custom_call.1} parent=1 // loop_header_branch
      %17 = sbr.rel (%p15) target = $region8
    $region5: #{tpu_custom_call.1} parent=1 // loop_body
      %s19 = ssub.s32 %s14, 1
      %s20 = ssub.s32 %s14, 2
      %s27 = sadd.s32 1, %s22
      %p28 = scmp.ge.s32.totalorder %s27, 1
      %s29 = scalar_select %p28, 0, %s27
      %s30 = sadd.s32 1, %s21
      %s31 = scalar_select %p28, %s30, %s21
      %p32 = scmp.ge.s32.totalorder %s31, 2
      %s33 = scalar_select %p32, 0, %s31
      %s34 = ssub.s32 %s21, %s33
      %s35 = ssub.s32 %s22, %s29
      %s36 = sor.u32 %s34, %s35
      %p37 = scmp.eq.s32.totalorder %s36, 0
      %s39 = sadd.s32 %s38, 1
      %s40 = scalar_select %p37, %s38, %s39
      %p43 = pneg %p37
      %p44 = scmp.eq.s32.totalorder %s14, 1
      %p45 = por %p43, %p44
      %p46 = scmp.ne.s32.totalorder %s38, %s41
      %p47 = scmp.eq.s32.totalorder %s14, 0
      %p48 = por %p46, %p47
      %p49 = scmp.ne.s32.totalorder %s38, %s41
      %p50 = scmp.eq.s32.totalorder %s19, 1
      %p51 = por %p49, %p50
      %p52 = scmp.ne.s32.totalorder %s41, %s42
      %p53 = scmp.eq.s32.totalorder %s19, 0
      %p54 = por %p52, %p53
      %p55 = scmp.ne.s32.totalorder %s41, %s42
      %p56 = scmp.eq.s32.totalorder %s20, 1
      %p57 = por %p55, %p56
      %p59 = scmp.ne.s32.totalorder %s42, %s58
      %p60 = scmp.eq.s32.totalorder %s20, 0
      %p61 = por %p59, %p60
      %s63 = sadd.s32 %s62, 1
      %p66 = scmp.eq.s32.totalorder %s14, 1
      %p67 = scmp.ne.s32.totalorder %s62, %s64
      %p68 = scmp.eq.s32.totalorder %s14, 0
      %p69 = por %p67, %p68
      %p70 = scmp.ne.s32.totalorder %s62, %s64
      %p71 = scmp.eq.s32.totalorder %s19, 1
      %p72 = por %p70, %p71
      %p73 = scmp.ne.s32.totalorder %s64, %s65
      %p74 = scmp.eq.s32.totalorder %s19, 0
      %p75 = por %p73, %p74
      %p76 = scmp.ne.s32.totalorder %s64, %s65
      %p77 = scmp.eq.s32.totalorder %s20, 1
      %p78 = por %p76, %p77
      %p80 = scmp.ne.s32.totalorder %s65, %s79
      %p81 = scmp.eq.s32.totalorder %s20, 0
      %p82 = por %p80, %p81
      %s84 = sadd.s32 %s83, 1
      %p87 = scmp.eq.s32.totalorder %s14, 1
      %p88 = scmp.ne.s32.totalorder %s83, %s85
      %p89 = scmp.eq.s32.totalorder %s14, 0
      %p90 = por %p88, %p89
      %p91 = scmp.ne.s32.totalorder %s83, %s85
      %p92 = scmp.eq.s32.totalorder %s19, 1
      %p93 = por %p91, %p92
      %p94 = scmp.ne.s32.totalorder %s85, %s86
      %p95 = scmp.eq.s32.totalorder %s19, 0
      %p96 = por %p94, %p95
      %p97 = scmp.ne.s32.totalorder %s85, %s86
      %p98 = scmp.eq.s32.totalorder %s20, 1
      %p99 = por %p97, %p98
      %p101 = scmp.ne.s32.totalorder %s86, %s100
      %p102 = scmp.eq.s32.totalorder %s20, 0
      %p103 = por %p101, %p102
      %s105 = sadd.s32 %s104, 1
      %p108 = scmp.eq.s32.totalorder %s14, 1
      %p109 = scmp.ne.s32.totalorder %s104, %s106
      %p110 = scmp.eq.s32.totalorder %s14, 0
      %p111 = por %p109, %p110
      %p112 = scmp.ne.s32.totalorder %s104, %s106
      %p113 = scmp.eq.s32.totalorder %s19, 1
      %p114 = por %p112, %p113
      %p115 = scmp.ne.s32.totalorder %s106, %s107
      %p116 = scmp.eq.s32.totalorder %s19, 0
      %p117 = por %p115, %p116
      %p118 = scmp.ne.s32.totalorder %s106, %s107
      %p119 = scmp.eq.s32.totalorder %s20, 1
      %p120 = por %p118, %p119
      %p122 = scmp.ne.s32.totalorder %s107, %s121
      %p123 = scmp.eq.s32.totalorder %s20, 0
      %p124 = por %p122, %p123
      %s126 = sadd.s32 %s125, 1
      %p129 = scmp.eq.s32.totalorder %s14, 1
      %p130 = scmp.ne.s32.totalorder %s125, %s127
      %p131 = scmp.eq.s32.totalorder %s14, 0
      %p132 = por %p130, %p131
      %p133 = scmp.ne.s32.totalorder %s125, %s127
      %p134 = scmp.eq.s32.totalorder %s19, 1
      %p135 = por %p133, %p134
      %p136 = scmp.ne.s32.totalorder %s127, %s128
      %p137 = scmp.eq.s32.totalorder %s19, 0
      %p138 = por %p136, %p137
      %p139 = scmp.ne.s32.totalorder %s127, %s128
      %p140 = scmp.eq.s32.totalorder %s20, 1
      %p141 = por %p139, %p140
      %p143 = scmp.ne.s32.totalorder %s128, %s142
      %p144 = scmp.eq.s32.totalorder %s20, 0
      %p145 = por %p143, %p144
      %s146 = ssub.s32 %s21, %s33
      %s147 = ssub.s32 %s22, %s29
      %s148 = sor.u32 %s146, %s147
      %p149 = scmp.eq.s32.totalorder %s148, 0
      %s151 = sadd.s32 %s150, 1
      %s152 = scalar_select %p149, %s150, %s151
      %p155 = pneg %p149
      %p156 = scmp.eq.s32.totalorder %s14, 1
      %p157 = por %p155, %p156
      %p158 = scmp.ne.s32.totalorder %s150, %s153
      %p159 = scmp.eq.s32.totalorder %s14, 0
      %p160 = por %p158, %p159
      %p161 = scmp.ne.s32.totalorder %s150, %s153
      %p162 = scmp.eq.s32.totalorder %s19, 1
      %p163 = por %p161, %p162
      %p164 = scmp.ne.s32.totalorder %s153, %s154
      %p165 = scmp.eq.s32.totalorder %s19, 0
      %p166 = por %p164, %p165
      %p167 = scmp.ne.s32.totalorder %s153, %s154
      %p168 = scmp.eq.s32.totalorder %s20, 1
      %p169 = por %p167, %p168
      %p171 = scmp.ne.s32.totalorder %s154, %s170
      %p172 = scmp.eq.s32.totalorder %s20, 0
      %p173 = por %p171, %p172
      %p174 = scmp.le.s32.totalorder 1, %s14
      %p175 = scmp.lt.s32.totalorder %s14, 3
      %p176 = pnand %p174, %p175
      %p177 = pneg %p176
      // Predicated region
      $region9: #{tpu_custom_call.1} parent=5 // pred_check
        _
      $region10: #{tpu_custom_call.1} parent=5 // pred_check_branch
        %179 = sbr.rel (%p176) target = $region12
      $region11: #{tpu_custom_call.1} parent=5 // pred_region
        %s180 = ssub.s32 %s14, 1
        // Predicated region
        $region13: #{tpu_custom_call.1} parent=11 // pred_check
          %p181 = pneg %p75
        $region14: #{tpu_custom_call.1} parent=11 // pred_check_branch
          %183 = sbr.rel (%p181) target = $region16
        $region15: #{tpu_custom_call.1} parent=11 // pred_region
          _
        $region16: #{tpu_custom_call.1} parent=11 // pred_fallthru
          _
        // Predicated region
        $region17: #{tpu_custom_call.1} parent=11 // pred_check
          %p184 = pneg %p96
        $region18: #{tpu_custom_call.1} parent=11 // pred_check_branch
          %186 = sbr.rel (%p184) target = $region20
        $region19: #{tpu_custom_call.1} parent=11 // pred_region
          _
        $region20: #{tpu_custom_call.1} parent=11 // pred_fallthru
          _
        // Predicated region
        $region21: #{tpu_custom_call.1} parent=11 // pred_check
          %p187 = pneg %p117
        $region22: #{tpu_custom_call.1} parent=11 // pred_check_branch
          %189 = sbr.rel (%p187) target = $region24
        $region23: #{tpu_custom_call.1} parent=11 // pred_region
          _
        $region24: #{tpu_custom_call.1} parent=11 // pred_fallthru
          _
        // Predicated region
        $region25: #{tpu_custom_call.1} parent=11 // pred_check
          %p190 = pneg %p138
        $region26: #{tpu_custom_call.1} parent=11 // pred_check_branch
          %192 = sbr.rel (%p190) target = $region28
        $region27: #{tpu_custom_call.1} parent=11 // pred_region
          _
        $region28: #{tpu_custom_call.1} parent=11 // pred_fallthru
          _
      $region12: #{tpu_custom_call.1} parent=5 // pred_fallthru
        _
      %p193 = scmp.lt.s32.totalorder %s14, 2
      // Predicated region
      $region29: #{tpu_custom_call.1} parent=5 // pred_check
        %p194 = pneg %p193
      $region30: #{tpu_custom_call.1} parent=5 // pred_check_branch
        %196 = sbr.rel (%p194) target = $region32
      $region31: #{tpu_custom_call.1} parent=5 // pred_region
        // Predicated region
        $region33: #{tpu_custom_call.1} parent=31 // pred_check
          %p197 = pneg %p48
        $region34: #{tpu_custom_call.1} parent=31 // pred_check_branch
          %199 = sbr.rel (%p197) target = $region36
        $region35: #{tpu_custom_call.1} parent=31 // pred_region
          %s200 = smul.u32 2, %s22
          %p201 = scmp.lt.s32.totalorder %s21, 1
          %s202 = scalar_select %p201, %s21, 1
          %p203 = scmp.lt.s32.totalorder %s200, 1
          %s204 = scalar_select %p203, %s200, 1
          %s205 = smul.addr %s202, 2
          %s206 = sadd.s32 %s204, %s205
          %s207 = smul.addr %s206, 4
          %s208 = scalar_lea.vmem %s0, %s207
          %s209 = smul.u32 2, %s22
        $region36: #{tpu_custom_call.1} parent=31 // pred_fallthru
          _
      $region32: #{tpu_custom_call.1} parent=5 // pred_fallthru
        _
      %p210 = scmp.le.s32.totalorder 1, %s14
      %p211 = scmp.lt.s32.totalorder %s14, 3
      %p212 = pnand %p210, %p211
      %p213 = pneg %p212
      // Predicated region
      $region37: #{tpu_custom_call.1} parent=5 // pred_check
        _
      $region38: #{tpu_custom_call.1} parent=5 // pred_check_branch
        %215 = sbr.rel (%p212) target = $region40
      $region39: #{tpu_custom_call.1} parent=5 // pred_region
        %s216 = ssub.s32 %s14, 1
        %s217 = smul.u32 2, %s24
        %p218 = scmp.lt.s32.totalorder %s23, 1
        %s219 = scalar_select %p218, %s23, 1
        %p220 = scmp.lt.s32.totalorder %s217, 1
        %s221 = scalar_select %p220, %s217, 1
        %s222 = smul.addr %s219, 2
        %s223 = sadd.s32 %s221, %s222
        %s224 = smul.addr %s223, 4
        %s225 = scalar_lea.vmem %s0, %s224
        %p226 = pneg %p54
        %p227 = pneg %p51
        %p228 = pneg %p75
        %p229 = pneg %p72
        %p230 = pneg %p96
        %p231 = pneg %p93
        %p232 = pneg %p117
        %p233 = pneg %p114
        %p234 = pneg %p138
        %p235 = pneg %p135
        %p236 = pneg %p166
        %p237 = pneg %p163
        %s238 = sand.u32 %s153, 1
        %s239 = scalar_lea.sflag [#allocation3], %s238
        %s240 = sand.u32 %s153, 1
        %s241 = smul.addr %s240, 8
        %s242 = scalar_lea.vmem [#allocation2], %s241
        %s243 = smul.u32 2, %s24
        %p244 = scmp.lt.s32.totalorder %s23, 1
        %s245 = scalar_select %p244, %s23, 1
        %p246 = scmp.lt.s32.totalorder %s243, 1
        %s247 = scalar_select %p246, %s243, 1
        %s248 = smul.addr %s245, 2
        %s249 = sadd.s32 %s247, %s248
        %s250 = smul.addr %s249, 4
        %s251 = scalar_lea.vmem %s0, %s250
        %s252 = smul.u32 2, %s24
        %s253 = smul.u32 2, %s24
        %v254 = vld [vmem:[%s251] sm:$0xff]
        %v255 = vld [vmem:[%s1] sm:$0xff]
        %v256 = vld [vmem:[%s2] sm:$0xff]
        %258 = vset.pattern.permute.xlu0 0
        %259 = vperm.xlu0 %258, %v256
        %v260 = vpop.permute.xlu0 %259
        %v263 = vcombine.high %v254, %v254
        %vm264 = vcmask 31744
        %v266 = vsel %vm264, %v255, 0
        %vm268 = vcmask 1043456
        %v269 = vsel %vm268, %v254, 0
        %v271 = vsel %vm268, %v263, 0
        %273 = vmatprep.subr.mxu0 0.0
        %274 = vmatpush1.msra.mxu0 0.0
        %275 = vmatprep.subr.mxu0 0.0
        %276 = vmatpush1.msra.mxu0 0.0
        %277 = vmatprep.subr.mxu0 0.0
        %278 = vmatpush1.msra.mxu0 0.0
        %279 = vmatprep.subr.mxu0 0.0
        %280 = vmatpush1.msra.mxu0 0.0
        %281 = vmatprep.subr.mxu0 0.0
        %282 = vmatpush1.msra.mxu0 0.0
        %283 = vmatprep.subr.mxu0 0.0
        %284 = vmatpush1.msra.mxu0 0.0
        %285 = vmatprep.subr.mxu0 0.0
        %286 = vmatpush1.msra.mxu0 0.0
        %287 = vmatprep.subr.mxu0 0.0
        %288 = vmatpush1.msra.mxu0 0.0
        %289 = vmatprep.subr.mxu0 0.0
        %290 = vmatpush1.msra.mxu0 0.0
        %291 = vmatprep.subr.mxu0 0.0
        %292 = vmatpush1.msra.mxu0 0.0
        %293 = vmatprep.subr.mxu0 0.0
        %294 = vmatpush1.msra.mxu0 0.0
        %295 = vmatprep.subr.mxu0 0.0
        %296 = vmatpush1.msra.mxu0 0.0
        %297 = vmatprep.subr.mxu0 0.0
        %298 = vmatpush1.msra.mxu0 0.0
        %299 = vmatprep.subr.mxu0 0.0
        %300 = vmatpush1.msra.mxu0 0.0
        %301 = vmatprep.subr.mxu0 0.0
        %302 = vmatpush1.msra.mxu0 0.0
        %303 = vmatprep.subr.mxu0 %v271
        %304 = vmatpush1.msra.mxu0 %v269
        %305 = vmatprep.subr.mxu0 0.0
        %306 = vmatpush2.msra.mxu0 0.0
        %307 = vmatprep.subr.mxu0 0.0
        %308 = vmatpush2.msra.mxu0 0.0
        %309 = vmatprep.subr.mxu0 0.0
        %310 = vmatpush2.msra.mxu0 0.0
        %311 = vmatprep.subr.mxu0 0.0
        %312 = vmatpush2.msra.mxu0 0.0
        %313 = vmatprep.subr.mxu0 0.0
        %314 = vmatpush2.msra.mxu0 0.0
        %315 = vmatprep.subr.mxu0 0.0
        %316 = vmatpush2.msra.mxu0 0.0
        %317 = vmatprep.subr.mxu0 0.0
        %318 = vmatpush2.msra.mxu0 0.0
        %319 = vmatprep.subr.mxu0 0.0
        %320 = vmatpush2.msra.mxu0 0.0
        %321 = vmatprep.subr.mxu0 0.0
        %322 = vmatpush2.msra.mxu0 0.0
        %323 = vmatprep.subr.mxu0 0.0
        %324 = vmatpush2.msra.mxu0 0.0
        %325 = vmatprep.subr.mxu0 0.0
        %326 = vmatpush2.msra.mxu0 0.0
        %327 = vmatprep.subr.mxu0 0.0
        %328 = vmatpush2.msra.mxu0 0.0
        %329 = vmatprep.subr.mxu0 0.0
        %330 = vmatpush2.msra.mxu0 0.0
        %331 = vmatprep.subr.mxu0 0.0
        %332 = vmatpush2.msra.mxu0 0.0
        %333 = vmatprep.subr.mxu0 0.0
        %334 = vmatpush2.msra.mxu0 0.0
        %335 = vmatprep.subr.mxu0 0.0
        %336 = vmatpush2.msra.mxu0 0.0
        %337 = vmatprep.mubr.f32.mxu0 0.0
        %338 = vmatmul.mubr.f32.gmra.mxu0 %v266
        %v339 = vpop.f32.mrf.mxu0
        %v340 = vadd.f32 %v260, %v339
        %v341 = vpop.f32.mrf.mxu0
        %v342 = vadd.f32 %v260, %v341
        %343 = vdwg.mxu0
        %v344 = vmax.f32 %v340, 0.0
        %v345 = vmax.f32 %v342, 0.0
        %v346 = vld [vmem:[%s3] sm:$0xf]
        %v347 = vld [vmem:[%s4] sm:$0xf]
        %349 = vset.pattern.permute.xlu0 0
        %350 = vperm.xlu0 %349, %v347
        %v351 = vpop.permute.xlu0 %350
        %vm353 = vcmask 64512
        %v355 = vsel %vm353, %v346, 0
        %357 = vmatprep.subr.mxu0 0.0
        %358 = vmatpush1.msra.mxu0 0.0
        %359 = vmatprep.subr.mxu0 0.0
        %360 = vmatpush1.msra.mxu0 0.0
        %361 = vmatprep.subr.mxu0 0.0
        %362 = vmatpush1.msra.mxu0 0.0
        %363 = vmatprep.subr.mxu0 0.0
        %364 = vmatpush1.msra.mxu0 0.0
        %365 = vmatprep.subr.mxu0 0.0
        %366 = vmatpush1.msra.mxu0 0.0
        %367 = vmatprep.subr.mxu0 0.0
        %368 = vmatpush1.msra.mxu0 0.0
        %369 = vmatprep.subr.mxu0 0.0
        %370 = vmatpush1.msra.mxu0 0.0
        %371 = vmatprep.subr.mxu0 0.0
        %372 = vmatpush1.msra.mxu0 0.0
        %373 = vmatprep.subr.mxu0 0.0
        %374 = vmatpush1.msra.mxu0 0.0
        %375 = vmatprep.subr.mxu0 0.0
        %376 = vmatpush1.msra.mxu0 0.0
        %377 = vmatprep.subr.mxu0 0.0
        %378 = vmatpush1.msra.mxu0 0.0
        %379 = vmatprep.subr.mxu0 0.0
        %380 = vmatpush1.msra.mxu0 0.0
        %381 = vmatprep.subr.mxu0 0.0
        %382 = vmatpush1.msra.mxu0 0.0
        %383 = vmatprep.subr.mxu0 0.0
        %384 = vmatpush1.msra.mxu0 0.0
        %385 = vmatprep.subr.mxu0 0.0
        %386 = vmatpush1.msra.mxu0 0.0
        %387 = vmatprep.subr.mxu0 %v345
        %388 = vmatpush1.msra.mxu0 %v344
        %389 = vmatprep.subr.mxu0 0.0
        %390 = vmatpush2.msra.mxu0 0.0
        %391 = vmatprep.subr.mxu0 0.0
        %392 = vmatpush2.msra.mxu0 0.0
        %393 = vmatprep.subr.mxu0 0.0
        %394 = vmatpush2.msra.mxu0 0.0
        %395 = vmatprep.subr.mxu0 0.0
        %396 = vmatpush2.msra.mxu0 0.0
        %397 = vmatprep.subr.mxu0 0.0
        %398 = vmatpush2.msra.mxu0 0.0
        %399 = vmatprep.subr.mxu0 0.0
        %400 = vmatpush2.msra.mxu0 0.0
        %401 = vmatprep.subr.mxu0 0.0
        %402 = vmatpush2.msra.mxu0 0.0
        %403 = vmatprep.subr.mxu0 0.0
        %404 = vmatpush2.msra.mxu0 0.0
        %405 = vmatprep.subr.mxu0 0.0
        %406 = vmatpush2.msra.mxu0 0.0
        %407 = vmatprep.subr.mxu0 0.0
        %408 = vmatpush2.msra.mxu0 0.0
        %409 = vmatprep.subr.mxu0 0.0
        %410 = vmatpush2.msra.mxu0 0.0
        %411 = vmatprep.subr.mxu0 0.0
        %412 = vmatpush2.msra.mxu0 0.0
        %413 = vmatprep.subr.mxu0 0.0
        %414 = vmatpush2.msra.mxu0 0.0
        %415 = vmatprep.subr.mxu0 0.0
        %416 = vmatpush2.msra.mxu0 0.0
        %417 = vmatprep.subr.mxu0 0.0
        %418 = vmatpush2.msra.mxu0 0.0
        %419 = vmatprep.subr.mxu0 0.0
        %420 = vmatpush2.msra.mxu0 0.0
        %421 = vmatprep.mubr.f32.mxu0 0.0
        %422 = vmatmul.mubr.f32.gmra.mxu0 %v355
        %v423 = vpop.f32.mrf.mxu0
        %v424 = vadd.f32 %v351, %v423
        %v425 = vpop.f32.mrf.mxu0
        %v426 = vadd.f32 %v351, %v425
        %427 = vdwg.mxu0
        %v428 = vsub.f32 0.0, %v424
        %v429 = vsub.f32 0.0, %v426
        %v430 = vmul.f32 %v428, 1.442695
        %v431 = vpow.pop %v430
        %v432 = vmul.f32 %v429, 1.442695
        %v433 = vpow.pop %v432
        %v434 = vadd.f32 %v431, 1.0
        %v435 = vadd.f32 %v433, 1.0
        %v436 = vrcp.pop %v434
        %v437 = vmul.f32 1.0, %v436
        %v438 = vrcp.pop %v435
        %v439 = vmul.f32 1.0, %v438
        %v442 = vcombine.low %v437, %v439
        %444 = vst [vmem:[%s242] sm:$0xff] %v442
        %s445 = sand.u32 %s153, 1
        %s446 = scalar_lea.sflag [#allocation3], %s445
        %s447 = sand.u32 %s153, 1
        %s448 = smul.addr %s447, 8
        %s449 = scalar_lea.vmem [#allocation2], %s448
        // Predicated region
        $region41: #{tpu_custom_call.1} parent=39 // pred_check
          %p450 = pneg %p163
        $region42: #{tpu_custom_call.1} parent=39 // pred_check_branch
          %452 = sbr.rel (%p450) target = $region44
        $region43: #{tpu_custom_call.1} parent=39 // pred_region
          %s453 = smul.u32 2, %s24
          %s455 = ssub.s32 128, 128
          %456 = vsyncadd %s446, %s455
          %s457 = smul.addr %s23, 2
          %s458 = sadd.s32 %s453, %s457
          %s459 = smul.addr %s458, 64
          %s460 = scalar_lea.hbm %s5, %s459
          %s462 = sshll.u32 %s449, 4
          %s463 = int_to_ptr.vmem [resolvable:$true] %s462
          %465 = dma.vmem_to_hbm [thread:$0]  %s463, 128, %s460, %s446
        $region44: #{tpu_custom_call.1} parent=39 // pred_fallthru
          _
      $region40: #{tpu_custom_call.1} parent=5 // pred_fallthru
        _
      %p466 = scmp.le.s32.totalorder 2, %s14
      // Predicated region
      $region45: #{tpu_custom_call.1} parent=5 // pred_check
        %p467 = pneg %p466
      $region46: #{tpu_custom_call.1} parent=5 // pred_check_branch
        %469 = sbr.rel (%p467) target = $region48
      $region47: #{tpu_custom_call.1} parent=5 // pred_region
        %s470 = ssub.s32 %s14, 2
        // Predicated region
        $region49: #{tpu_custom_call.1} parent=47 // pred_check
          %p471 = pneg %p169
        $region50: #{tpu_custom_call.1} parent=47 // pred_check_branch
          %473 = sbr.rel (%p471) target = $region52
        $region51: #{tpu_custom_call.1} parent=47 // pred_region
          %s474 = sand.u32 %s154, 1
          %s475 = scalar_lea.sflag [#allocation3], %s474
          %s476 = sand.u32 %s154, 1
          %s477 = smul.addr %s476, 8
          %s478 = scalar_lea.vmem [#allocation2], %s477
          %479 = dma.done %s475, 128
        $region52: #{tpu_custom_call.1} parent=47 // pred_fallthru
          _
      $region48: #{tpu_custom_call.1} parent=5 // pred_fallthru
        _
    $region6: #{tpu_custom_call.1} parent=1 // loop_footer
      %s18 = sadd.s32 1, %s14
    $region7: #{tpu_custom_call.1} parent=1 // loop_footer_branch
      %13 = sbr.rel target = $region3
    $region8: #{tpu_custom_call.1} parent=1 // loop_exit
      _
    %480 = vsyncpa [#allocation3], 1
    %s481 = scalar_lea.sflag [#allocation3], 1
    %482 = vsyncpa %s481, 1

// kernel: tpu_custom_call.1
$region0: #{tpu_custom_call.1}
  #allocation0 [shape = 'u32[]', space=smem, size = 0x4, offset = 0x4, fixed_abs, tag = 'smem constant byte address 0x4 - core index']
  #allocation1 [shape = 'u32[144,128]{1,0:T(1,128)}', space=vmem, size = 0x12000, scoped, tag = 'internal scratch']
  %s0 = inlined_call_operand.vmem [shape: f32[2,4,256], index: 0, kind: input, shape index: {}]
  %s1 = inlined_call_operand.vmem [shape: f32[8,4], index: 1, kind: input, shape index: {}]
  %s2 = inlined_call_operand.vmem [shape: f32[8,1], index: 2, kind: input, shape index: {}]
  %s3 = inlined_call_operand.vmem [shape: f32[4,8], index: 3, kind: input, shape index: {}]
  %s4 = inlined_call_operand.vmem [shape: f32[4,1], index: 4, kind: input, shape index: {}]
  %s5 = inlined_call_operand.hbm [shape: f32[2,4,256], index: 5, kind: output, shape index: {}]
  %s6 = sld [smem:[#allocation0]]
  $region53: #{tpu_custom_call.1} parent=0
    _
  %s8 = ssub.s32 1, %s6
  %s9 = scalar_select 0, %s8, %s6
  $region1: #{tpu_custom_call.1} parent=0
    #allocation2 [shape = 'u8[8192]{0}', space=vmem, size = 0x2000, scoped, tag = 'output window, operand 0']
    #allocation3 [shape = 's32[2]{0}', space=sflag, size = 0x8, scoped, tag = 'scoped memory for tpu_custom_call.1']
    %10 = vsyncpa [#allocation3], 0
    %s11 = scalar_lea.sflag [#allocation3], 1
    %12 = vsyncpa %s11, 0
    loop: start=0, step=1, limit=4
    $region2: #{tpu_custom_call.1} parent=1 // loop_pre_header
      _
    $region3: #{tpu_custom_call.1} parent=1 // loop_header
      %s14 = sphi 0, %s18
      %p15 = scmp.ge.s32.totalorder %s14, 4
      %s21 = sphi 0, %s33
      %s22 = sphi 0, %s29
      %s23 = sphi 0, %s21
      %s24 = sphi 0, %s22
      %s25 = sphi 0, %s23
      %s26 = sphi 0, %s24
      %s38 = sphi 0, %s40
      %s41 = sphi 0, %s38
      %s42 = sphi 0, %s41
      %s58 = sphi 0, %s42
      %s62 = sphi 0, %s62
      %s64 = sphi 0, %s62
      %s65 = sphi 0, %s64
      %s79 = sphi 0, %s65
      %s83 = sphi 0, %s83
      %s85 = sphi 0, %s83
      %s86 = sphi 0, %s85
      %s100 = sphi 0, %s86
      %s104 = sphi 0, %s104
      %s106 = sphi 0, %s104
      %s107 = sphi 0, %s106
      %s121 = sphi 0, %s107
      %s125 = sphi 0, %s125
      %s127 = sphi 0, %s125
      %s128 = sphi 0, %s127
      %s142 = sphi 0, %s128
      %s150 = sphi 0, %s152
      %s153 = sphi 0, %s150
      %s154 = sphi 0, %s153
      %s170 = sphi 0, %s154
    $region4: #{tpu_custom_call.1} parent=1 // loop_header_branch
      %17 = sbr.rel (%p15) target = $region8
    $region5: #{tpu_custom_call.1} parent=1 // loop_body
      %s19 = ssub.s32 %s14, 1
      %s20 = ssub.s32 %s14, 2
      %s27 = sadd.s32 1, %s22
      %p28 = scmp.ge.s32.totalorder %s27, 1
      %s29 = scalar_select %p28, 0, %s27
      %s30 = sadd.s32 1, %s21
      %s31 = scalar_select %p28, %s30, %s21
      %p32 = scmp.ge.s32.totalorder %s31, 2
      %s33 = scalar_select %p32, 0, %s31
      %s34 = ssub.s32 %s21, %s33
      %s35 = ssub.s32 %s22, %s29
      %s36 = sor.u32 %s34, %s35
      %p37 = scmp.eq.s32.totalorder %s36, 0
      %s39 = sadd.s32 %s38, 1
      %s40 = scalar_select %p37, %s38, %s39
      %p43 = pneg %p37
      %p44 = scmp.eq.s32.totalorder %s14, 1
      %p45 = por %p43, %p44
      %p46 = scmp.ne.s32.totalorder %s38, %s41
      %p47 = scmp.eq.s32.totalorder %s14, 0
      %p48 = por %p46, %p47
      %p49 = scmp.ne.s32.totalorder %s38, %s41
      %p50 = scmp.eq.s32.totalorder %s19, 1
      %p51 = por %p49, %p50
      %p52 = scmp.ne.s32.totalorder %s41, %s42
      %p53 = scmp.eq.s32.totalorder %s19, 0
      %p54 = por %p52, %p53
      %p55 = scmp.ne.s32.totalorder %s41, %s42
      %p56 = scmp.eq.s32.totalorder %s20, 1
      %p57 = por %p55, %p56
      %p59 = scmp.ne.s32.totalorder %s42, %s58
      %p60 = scmp.eq.s32.totalorder %s20, 0
      %p61 = por %p59, %p60
      %s63 = sadd.s32 %s62, 1
      %p66 = scmp.eq.s32.totalorder %s14, 1
      %p67 = scmp.ne.s32.totalorder %s62, %s64
      %p68 = scmp.eq.s32.totalorder %s14, 0
      %p69 = por %p67, %p68
      %p70 = scmp.ne.s32.totalorder %s62, %s64
      %p71 = scmp.eq.s32.totalorder %s19, 1
      %p72 = por %p70, %p71
      %p73 = scmp.ne.s32.totalorder %s64, %s65
      %p74 = scmp.eq.s32.totalorder %s19, 0
      %p75 = por %p73, %p74
      %p76 = scmp.ne.s32.totalorder %s64, %s65
      %p77 = scmp.eq.s32.totalorder %s20, 1
      %p78 = por %p76, %p77
      %p80 = scmp.ne.s32.totalorder %s65, %s79
      %p81 = scmp.eq.s32.totalorder %s20, 0
      %p82 = por %p80, %p81
      %s84 = sadd.s32 %s83, 1
      %p87 = scmp.eq.s32.totalorder %s14, 1
      %p88 = scmp.ne.s32.totalorder %s83, %s85
      %p89 = scmp.eq.s32.totalorder %s14, 0
      %p90 = por %p88, %p89
      %p91 = scmp.ne.s32.totalorder %s83, %s85
      %p92 = scmp.eq.s32.totalorder %s19, 1
      %p93 = por %p91, %p92
      %p94 = scmp.ne.s32.totalorder %s85, %s86
      %p95 = scmp.eq.s32.totalorder %s19, 0
      %p96 = por %p94, %p95
      %p97 = scmp.ne.s32.totalorder %s85, %s86
      %p98 = scmp.eq.s32.totalorder %s20, 1
      %p99 = por %p97, %p98
      %p101 = scmp.ne.s32.totalorder %s86, %s100
      %p102 = scmp.eq.s32.totalorder %s20, 0
      %p103 = por %p101, %p102
      %s105 = sadd.s32 %s104, 1
      %p108 = scmp.eq.s32.totalorder %s14, 1
      %p109 = scmp.ne.s32.totalorder %s104, %s106
      %p110 = scmp.eq.s32.totalorder %s14, 0
      %p111 = por %p109, %p110
      %p112 = scmp.ne.s32.totalorder %s104, %s106
      %p113 = scmp.eq.s32.totalorder %s19, 1
      %p114 = por %p112, %p113
      %p115 = scmp.ne.s32.totalorder %s106, %s107
      %p116 = scmp.eq.s32.totalorder %s19, 0
      %p117 = por %p115, %p116
      %p118 = scmp.ne.s32.totalorder %s106, %s107
      %p119 = scmp.eq.s32.totalorder %s20, 1
      %p120 = por %p118, %p119
      %p122 = scmp.ne.s32.totalorder %s107, %s121
      %p123 = scmp.eq.s32.totalorder %s20, 0
      %p124 = por %p122, %p123
      %s126 = sadd.s32 %s125, 1
      %p129 = scmp.eq.s32.totalorder %s14, 1
      %p130 = scmp.ne.s32.totalorder %s125, %s127
      %p131 = scmp.eq.s32.totalorder %s14, 0
      %p132 = por %p130, %p131
      %p133 = scmp.ne.s32.totalorder %s125, %s127
      %p134 = scmp.eq.s32.totalorder %s19, 1
      %p135 = por %p133, %p134
      %p136 = scmp.ne.s32.totalorder %s127, %s128
      %p137 = scmp.eq.s32.totalorder %s19, 0
      %p138 = por %p136, %p137
      %p139 = scmp.ne.s32.totalorder %s127, %s128
      %p140 = scmp.eq.s32.totalorder %s20, 1
      %p141 = por %p139, %p140
      %p143 = scmp.ne.s32.totalorder %s128, %s142
      %p144 = scmp.eq.s32.totalorder %s20, 0
      %p145 = por %p143, %p144
      %s146 = ssub.s32 %s21, %s33
      %s147 = ssub.s32 %s22, %s29
      %s148 = sor.u32 %s146, %s147
      %p149 = scmp.eq.s32.totalorder %s148, 0
      %s151 = sadd.s32 %s150, 1
      %s152 = scalar_select %p149, %s150, %s151
      %p155 = pneg %p149
      %p156 = scmp.eq.s32.totalorder %s14, 1
      %p157 = por %p155, %p156
      %p158 = scmp.ne.s32.totalorder %s150, %s153
      %p159 = scmp.eq.s32.totalorder %s14, 0
      %p160 = por %p158, %p159
      %p161 = scmp.ne.s32.totalorder %s150, %s153
      %p162 = scmp.eq.s32.totalorder %s19, 1
      %p163 = por %p161, %p162
      %p164 = scmp.ne.s32.totalorder %s153, %s154
      %p165 = scmp.eq.s32.totalorder %s19, 0
      %p166 = por %p164, %p165
      %p167 = scmp.ne.s32.totalorder %s153, %s154
      %p168 = scmp.eq.s32.totalorder %s20, 1
      %p169 = por %p167, %p168
      %p171 = scmp.ne.s32.totalorder %s154, %s170
      %p172 = scmp.eq.s32.totalorder %s20, 0
      %p173 = por %p171, %p172
      %p174 = scmp.le.s32.totalorder 1, %s14
      %p175 = scmp.lt.s32.totalorder %s14, 3
      %p176 = pnand %p174, %p175
      %p177 = pneg %p176
      // Predicated region
      $region9: #{tpu_custom_call.1} parent=5 // pred_check
        _
      $region10: #{tpu_custom_call.1} parent=5 // pred_check_branch
        %179 = sbr.rel (%p176) target = $region12
      $region11: #{tpu_custom_call.1} parent=5 // pred_region
        %s180 = ssub.s32 %s14, 1
        // Predicated region
        $region13: #{tpu_custom_call.1} parent=11 // pred_check
          %p181 = pneg %p75
        $region14: #{tpu_custom_call.1} parent=11 // pred_check_branch
          %183 = sbr.rel (%p181) target = $region16
        $region15: #{tpu_custom_call.1} parent=11 // pred_region
          _
        $region16: #{tpu_custom_call.1} parent=11 // pred_fallthru
          _
        // Predicated region
        $region17: #{tpu_custom_call.1} parent=11 // pred_check
          %p184 = pneg %p96
        $region18: #{tpu_custom_call.1} parent=11 // pred_check_branch
          %186 = sbr.rel (%p184) target = $region20
        $region19: #{tpu_custom_call.1} parent=11 // pred_region
          _
        $region20: #{tpu_custom_call.1} parent=11 // pred_fallthru
          _
        // Predicated region
        $region21: #{tpu_custom_call.1} parent=11 // pred_check
          %p187 = pneg %p117
        $region22: #{tpu_custom_call.1} parent=11 // pred_check_branch
          %189 = sbr.rel (%p187) target = $region24
        $region23: #{tpu_custom_call.1} parent=11 // pred_region
          _
        $region24: #{tpu_custom_call.1} parent=11 // pred_fallthru
          _
        // Predicated region
        $region25: #{tpu_custom_call.1} parent=11 // pred_check
          %p190 = pneg %p138
        $region26: #{tpu_custom_call.1} parent=11 // pred_check_branch
          %192 = sbr.rel (%p190) target = $region28
        $region27: #{tpu_custom_call.1} parent=11 // pred_region
          _
        $region28: #{tpu_custom_call.1} parent=11 // pred_fallthru
          _
      $region12: #{tpu_custom_call.1} parent=5 // pred_fallthru
        _
      %p193 = scmp.lt.s32.totalorder %s14, 2
      // Predicated region
      $region29: #{tpu_custom_call.1} parent=5 // pred_check
        %p194 = pneg %p193
      $region30: #{tpu_custom_call.1} parent=5 // pred_check_branch
        %196 = sbr.rel (%p194) target = $region32
      $region31: #{tpu_custom_call.1} parent=5 // pred_region
        // Predicated region
        $region33: #{tpu_custom_call.1} parent=31 // pred_check
          %p197 = pneg %p48
        $region34: #{tpu_custom_call.1} parent=31 // pred_check_branch
          %199 = sbr.rel (%p197) target = $region36
        $region35: #{tpu_custom_call.1} parent=31 // pred_region
          %s200 = smul.u32 2, %s22
          %p201 = scmp.lt.s32.totalorder %s21, 1
          %s202 = scalar_select %p201, %s21, 1
          %p203 = scmp.lt.s32.totalorder %s200, 1
          %s204 = scalar_select %p203, %s200, 1
          %s205 = smul.addr %s202, 2
          %s206 = sadd.s32 %s204, %s205
          %s207 = smul.addr %s206, 4
          %s208 = scalar_lea.vmem %s0, %s207
          %s209 = smul.u32 2, %s22
        $region36: #{tpu_custom_call.1} parent=31 // pred_fallthru
          _
      $region32: #{tpu_custom_call.1} parent=5 // pred_fallthru
        _
      %p210 = scmp.le.s32.totalorder 1, %s14
      %p211 = scmp.lt.s32.totalorder %s14, 3
      %p212 = pnand %p210, %p211
      %p213 = pneg %p212
      // Predicated region
      $region37: #{tpu_custom_call.1} parent=5 // pred_check
        _
      $region38: #{tpu_custom_call.1} parent=5 // pred_check_branch
        %215 = sbr.rel (%p212) target = $region40
      $region39: #{tpu_custom_call.1} parent=5 // pred_region
        %s216 = ssub.s32 %s14, 1
        %s217 = smul.u32 2, %s24
        %p218 = scmp.lt.s32.totalorder %s23, 1
        %s219 = scalar_select %p218, %s23, 1
        %p220 = scmp.lt.s32.totalorder %s217, 1
        %s221 = scalar_select %p220, %s217, 1
        %s222 = smul.addr %s219, 2
        %s223 = sadd.s32 %s221, %s222
        %s224 = smul.addr %s223, 4
        %s225 = scalar_lea.vmem %s0, %s224
        %p226 = pneg %p54
        %p227 = pneg %p51
        %p228 = pneg %p75
        %p229 = pneg %p72
        %p230 = pneg %p96
        %p231 = pneg %p93
        %p232 = pneg %p117
        %p233 = pneg %p114
        %p234 = pneg %p138
        %p235 = pneg %p135
        %p236 = pneg %p166
        %p237 = pneg %p163
        %s238 = sand.u32 %s153, 1
        %s239 = scalar_lea.sflag [#allocation3], %s238
        %s240 = sand.u32 %s153, 1
        %s241 = smul.addr %s240, 8
        %s242 = scalar_lea.vmem [#allocation2], %s241
        %s243 = smul.u32 2, %s24
        %p244 = scmp.lt.s32.totalorder %s23, 1
        %s245 = scalar_select %p244, %s23, 1
        %p246 = scmp.lt.s32.totalorder %s243, 1
        %s247 = scalar_select %p246, %s243, 1
        %s248 = smul.addr %s245, 2
        %s249 = sadd.s32 %s247, %s248
        %s250 = smul.addr %s249, 4
        %s251 = scalar_lea.vmem %s0, %s250
        %s252 = smul.u32 2, %s24
        %s253 = smul.u32 2, %s24
        %v254 = vld [vmem:[%s251] sm:$0xff]
        %v255 = vld [vmem:[%s1] sm:$0xff]
        %v256 = vld [vmem:[%s2] sm:$0xff]
        %258 = vset.pattern.permute.xlu0 0
        %259 = vperm.xlu0 %258, %v256
        %v260 = vpop.permute.xlu0 %259
        %v263 = vcombine.high %v254, %v254
        %vm264 = vcmask 31744
        %v266 = vsel %vm264, %v255, 0
        %vm268 = vcmask 1043456
        %v269 = vsel %vm268, %v254, 0
        %v271 = vsel %vm268, %v263, 0
        %273 = vmatprep.subr.mxu0 0.0
        %274 = vmatpush1.msra.mxu0 0.0
        %275 = vmatprep.subr.mxu0 0.0
        %276 = vmatpush1.msra.mxu0 0.0
        %277 = vmatprep.subr.mxu0 0.0
        %278 = vmatpush1.msra.mxu0 0.0
        %279 = vmatprep.subr.mxu0 0.0
        %280 = vmatpush1.msra.mxu0 0.0
        %281 = vmatprep.subr.mxu0 0.0
        %282 = vmatpush1.msra.mxu0 0.0
        %283 = vmatprep.subr.mxu0 0.0
        %284 = vmatpush1.msra.mxu0 0.0
        %285 = vmatprep.subr.mxu0 0.0
        %286 = vmatpush1.msra.mxu0 0.0
        %287 = vmatprep.subr.mxu0 0.0
        %288 = vmatpush1.msra.mxu0 0.0
        %289 = vmatprep.subr.mxu0 0.0
        %290 = vmatpush1.msra.mxu0 0.0
        %291 = vmatprep.subr.mxu0 0.0
        %292 = vmatpush1.msra.mxu0 0.0
        %293 = vmatprep.subr.mxu0 0.0
        %294 = vmatpush1.msra.mxu0 0.0
        %295 = vmatprep.subr.mxu0 0.0
        %296 = vmatpush1.msra.mxu0 0.0
        %297 = vmatprep.subr.mxu0 0.0
        %298 = vmatpush1.msra.mxu0 0.0
        %299 = vmatprep.subr.mxu0 0.0
        %300 = vmatpush1.msra.mxu0 0.0
        %301 = vmatprep.subr.mxu0 0.0
        %302 = vmatpush1.msra.mxu0 0.0
        %303 = vmatprep.subr.mxu0 %v271
        %304 = vmatpush1.msra.mxu0 %v269
        %305 = vmatprep.subr.mxu0 0.0
        %306 = vmatpush2.msra.mxu0 0.0
        %307 = vmatprep.subr.mxu0 0.0
        %308 = vmatpush2.msra.mxu0 0.0
        %309 = vmatprep.subr.mxu0 0.0
        %310 = vmatpush2.msra.mxu0 0.0
        %311 = vmatprep.subr.mxu0 0.0
        %312 = vmatpush2.msra.mxu0 0.0
        %313 = vmatprep.subr.mxu0 0.0
        %314 = vmatpush2.msra.mxu0 0.0
        %315 = vmatprep.subr.mxu0 0.0
        %316 = vmatpush2.msra.mxu0 0.0
        %317 = vmatprep.subr.mxu0 0.0
        %318 = vmatpush2.msra.mxu0 0.0
        %319 = vmatprep.subr.mxu0 0.0
        %320 = vmatpush2.msra.mxu0 0.0
        %321 = vmatprep.subr.mxu0 0.0
        %322 = vmatpush2.msra.mxu0 0.0
        %323 = vmatprep.subr.mxu0 0.0
        %324 = vmatpush2.msra.mxu0 0.0
        %325 = vmatprep.subr.mxu0 0.0
        %326 = vmatpush2.msra.mxu0 0.0
        %327 = vmatprep.subr.mxu0 0.0
        %328 = vmatpush2.msra.mxu0 0.0
        %329 = vmatprep.subr.mxu0 0.0
        %330 = vmatpush2.msra.mxu0 0.0
        %331 = vmatprep.subr.mxu0 0.0
        %332 = vmatpush2.msra.mxu0 0.0
        %333 = vmatprep.subr.mxu0 0.0
        %334 = vmatpush2.msra.mxu0 0.0
        %335 = vmatprep.subr.mxu0 0.0
        %336 = vmatpush2.msra.mxu0 0.0
        %337 = vmatprep.mubr.f32.mxu0 0.0
        %338 = vmatmul.mubr.f32.gmra.mxu0 %v266
        %v339 = vpop.f32.mrf.mxu0
        %v340 = vadd.f32 %v260, %v339
        %v341 = vpop.f32.mrf.mxu0
        %v342 = vadd.f32 %v260, %v341
        %343 = vdwg.mxu0
        %v344 = vmax.f32 %v340, 0.0
        %v345 = vmax.f32 %v342, 0.0
        %v346 = vld [vmem:[%s3] sm:$0xf]
        %v347 = vld [vmem:[%s4] sm:$0xf]
        %349 = vset.pattern.permute.xlu0 0
        %350 = vperm.xlu0 %349, %v347
        %v351 = vpop.permute.xlu0 %350
        %vm353 = vcmask 64512
        %v355 = vsel %vm353, %v346, 0
        %357 = vmatprep.subr.mxu0 0.0
        %358 = vmatpush1.msra.mxu0 0.0
        %359 = vmatprep.subr.mxu0 0.0
        %360 = vmatpush1.msra.mxu0 0.0
        %361 = vmatprep.subr.mxu0 0.0
        %362 = vmatpush1.msra.mxu0 0.0
        %363 = vmatprep.subr.mxu0 0.0
        %364 = vmatpush1.msra.mxu0 0.0
        %365 = vmatprep.subr.mxu0 0.0
        %366 = vmatpush1.msra.mxu0 0.0
        %367 = vmatprep.subr.mxu0 0.0
        %368 = vmatpush1.msra.mxu0 0.0
        %369 = vmatprep.subr.mxu0 0.0
        %370 = vmatpush1.msra.mxu0 0.0
        %371 = vmatprep.subr.mxu0 0.0
        %372 = vmatpush1.msra.mxu0 0.0
        %373 = vmatprep.subr.mxu0 0.0
        %374 = vmatpush1.msra.mxu0 0.0
        %375 = vmatprep.subr.mxu0 0.0
        %376 = vmatpush1.msra.mxu0 0.0
        %377 = vmatprep.subr.mxu0 0.0
        %378 = vmatpush1.msra.mxu0 0.0
        %379 = vmatprep.subr.mxu0 0.0
        %380 = vmatpush1.msra.mxu0 0.0
        %381 = vmatprep.subr.mxu0 0.0
        %382 = vmatpush1.msra.mxu0 0.0
        %383 = vmatprep.subr.mxu0 0.0
        %384 = vmatpush1.msra.mxu0 0.0
        %385 = vmatprep.subr.mxu0 0.0
        %386 = vmatpush1.msra.mxu0 0.0
        %387 = vmatprep.subr.mxu0 %v345
        %388 = vmatpush1.msra.mxu0 %v344
        %389 = vmatprep.subr.mxu0 0.0
        %390 = vmatpush2.msra.mxu0 0.0
        %391 = vmatprep.subr.mxu0 0.0
        %392 = vmatpush2.msra.mxu0 0.0
        %393 = vmatprep.subr.mxu0 0.0
        %394 = vmatpush2.msra.mxu0 0.0
        %395 = vmatprep.subr.mxu0 0.0
        %396 = vmatpush2.msra.mxu0 0.0
        %397 = vmatprep.subr.mxu0 0.0
        %398 = vmatpush2.msra.mxu0 0.0
        %399 = vmatprep.subr.mxu0 0.0
        %400 = vmatpush2.msra.mxu0 0.0
        %401 = vmatprep.subr.mxu0 0.0
        %402 = vmatpush2.msra.mxu0 0.0
        %403 = vmatprep.subr.mxu0 0.0
        %404 = vmatpush2.msra.mxu0 0.0
        %405 = vmatprep.subr.mxu0 0.0
        %406 = vmatpush2.msra.mxu0 0.0
        %407 = vmatprep.subr.mxu0 0.0
        %408 = vmatpush2.msra.mxu0 0.0
        %409 = vmatprep.subr.mxu0 0.0
        %410 = vmatpush2.msra.mxu0 0.0
        %411 = vmatprep.subr.mxu0 0.0
        %412 = vmatpush2.msra.mxu0 0.0
        %413 = vmatprep.subr.mxu0 0.0
        %414 = vmatpush2.msra.mxu0 0.0
        %415 = vmatprep.subr.mxu0 0.0
        %416 = vmatpush2.msra.mxu0 0.0
        %417 = vmatprep.subr.mxu0 0.0
        %418 = vmatpush2.msra.mxu0 0.0
        %419 = vmatprep.subr.mxu0 0.0
        %420 = vmatpush2.msra.mxu0 0.0
        %421 = vmatprep.mubr.f32.mxu0 0.0
        %422 = vmatmul.mubr.f32.gmra.mxu0 %v355
        %v423 = vpop.f32.mrf.mxu0
        %v424 = vadd.f32 %v351, %v423
        %v425 = vpop.f32.mrf.mxu0
        %v426 = vadd.f32 %v351, %v425
        %427 = vdwg.mxu0
        %v428 = vsub.f32 0.0, %v424
        %v429 = vsub.f32 0.0, %v426
        %v430 = vmul.f32 %v428, 1.442695
        %v431 = vpow.pop %v430
        %v432 = vmul.f32 %v429, 1.442695
        %v433 = vpow.pop %v432
        %v434 = vadd.f32 %v431, 1.0
        %v435 = vadd.f32 %v433, 1.0
        %v436 = vrcp.pop %v434
        %v437 = vmul.f32 1.0, %v436
        %v438 = vrcp.pop %v435
        %v439 = vmul.f32 1.0, %v438
        %v442 = vcombine.low %v437, %v439
        %444 = vst [vmem:[%s242] sm:$0xff] %v442
        %s445 = sand.u32 %s153, 1
        %s446 = scalar_lea.sflag [#allocation3], %s445
        %s447 = sand.u32 %s153, 1
        %s448 = smul.addr %s447, 8
        %s449 = scalar_lea.vmem [#allocation2], %s448
        // Predicated region
        $region41: #{tpu_custom_call.1} parent=39 // pred_check
          %p450 = pneg %p163
        $region42: #{tpu_custom_call.1} parent=39 // pred_check_branch
          %452 = sbr.rel (%p450) target = $region44
        $region43: #{tpu_custom_call.1} parent=39 // pred_region
          %s453 = smul.u32 2, %s24
          %s455 = ssub.s32 128, 128
          %456 = vsyncadd %s446, %s455
          %s457 = smul.addr %s23, 2
          %s458 = sadd.s32 %s453, %s457
          %s459 = smul.addr %s458, 64
          %s460 = scalar_lea.hbm %s5, %s459
          %s462 = sshll.u32 %s449, 4
          %s463 = int_to_ptr.vmem [resolvable:$true] %s462
          %465 = dma.vmem_to_hbm [thread:$0]  %s463, 128, %s460, %s446
        $region44: #{tpu_custom_call.1} parent=39 // pred_fallthru
          _
      $region40: #{tpu_custom_call.1} parent=5 // pred_fallthru
        _
      %p466 = scmp.le.s32.totalorder 2, %s14
      // Predicated region
      $region45: #{tpu_custom_call.1} parent=5 // pred_check
        %p467 = pneg %p466
      $region46: #{tpu_custom_call.1} parent=5 // pred_check_branch
        %469 = sbr.rel (%p467) target = $region48
      $region47: #{tpu_custom_call.1} parent=5 // pred_region
        %s470 = ssub.s32 %s14, 2
        // Predicated region
        $region49: #{tpu_custom_call.1} parent=47 // pred_check
          %p471 = pneg %p169
        $region50: #{tpu_custom_call.1} parent=47 // pred_check_branch
          %473 = sbr.rel (%p471) target = $region52
        $region51: #{tpu_custom_call.1} parent=47 // pred_region
          %s474 = sand.u32 %s154, 1
          %s475 = scalar_lea.sflag [#allocation3], %s474
          %s476 = sand.u32 %s154, 1
          %s477 = smul.addr %s476, 8
          %s478 = scalar_lea.vmem [#allocation2], %s477
          %479 = dma.done %s475, 128
        $region52: #{tpu_custom_call.1} parent=47 // pred_fallthru
          _
      $region48: #{tpu_custom_call.1} parent=5 // pred_fallthru
        _
    $region6: #{tpu_custom_call.1} parent=1 // loop_footer
      %s18 = sadd.s32 1, %s14
    $region7: #{tpu_custom_call.1} parent=1 // loop_footer_branch
      %13 = sbr.rel target = $region3
    $region8: #{tpu_custom_call.1} parent=1 // loop_exit
      _
    %480 = vsyncpa [#allocation3], 1
    %s481 = scalar_lea.sflag [#allocation3], 1
    %482 = vsyncpa %s481, 1

</llo_original>
